<compile_context>
chip_gen: v6e
topology: v6e:2x2x1
jax: 0.10.0
libtpu: 0.0.40
codegen_flags: <defaults>
</compile_context>

<pallas_src>
import jax
import jax.numpy as jnp
from jax.experimental import pallas as pl
from jax.experimental.pallas import tpu as pltpu


def _round_up(x, m):
    return ((x + m - 1) // m) * m


# ---------------------------------------------------------------------------
# Kernels
# ---------------------------------------------------------------------------
def _fused_nok_kernel(adj_ref, x_ref, wt_ref, b_ref, out_ref):
    """out = ((adj_slab @ h) @ W^T) + b    (single K step, no accumulator)."""
    ah = jnp.dot(adj_ref[...].astype(x_ref.dtype), x_ref[...],
                 preferred_element_type=jnp.float32)
    out = jnp.dot(ah.astype(wt_ref.dtype), wt_ref[...],
                  preferred_element_type=jnp.float32) + b_ref[...]
    out_ref[...] = out.astype(out_ref.dtype)


def _premul_nok_kernel(adj_ref, x_ref, b_ref, out_ref):
    """out = (adj_slab @ (h @ W^T)) + b    (single K step, no accumulator)."""
    out = jnp.dot(adj_ref[...].astype(x_ref.dtype), x_ref[...],
                  preferred_element_type=jnp.float32) + b_ref[...]
    out_ref[...] = out.astype(out_ref.dtype)


def _fused_ktiled_kernel(adj_ref, x_ref, wt_ref, b_ref, out_ref, acc_ref):
    """K-tiled: acc += adj_tile @ h_tile; finalize with bf16 projection + bias."""
    k = pl.program_id(1)

    @pl.when(k == 0)
    def _():
        acc_ref[...] = jnp.zeros_like(acc_ref)

    acc_ref[...] += jnp.dot(adj_ref[...].astype(x_ref.dtype), x_ref[...],
                            preferred_element_type=jnp.float32)

    @pl.when(k == pl.num_programs(1) - 1)
    def _():
        out = jnp.dot(acc_ref[...].astype(wt_ref.dtype), wt_ref[...],
                      preferred_element_type=jnp.float32) + b_ref[...]
        out_ref[...] = out.astype(out_ref.dtype)


def _premul_ktiled_kernel(adj_ref, x_ref, b_ref, out_ref, acc_ref):
    """K-tiled: acc += adj_tile @ (hW^T)_tile; finalize with bias add."""
    k = pl.program_id(1)

    @pl.when(k == 0)
    def _():
        acc_ref[...] = jnp.zeros_like(acc_ref)

    acc_ref[...] += jnp.dot(adj_ref[...].astype(x_ref.dtype), x_ref[...],
                            preferred_element_type=jnp.float32)

    @pl.when(k == pl.num_programs(1) - 1)
    def _():
        out_ref[...] = (acc_ref[...] + b_ref[...]).astype(out_ref.dtype)


# ---------------------------------------------------------------------------
# Wrapper
# ---------------------------------------------------------------------------
def gconv(adj, h, weight, bias, *, tile_n=512, tile_k=2048,
          compute_dtype=jnp.bfloat16, out_dtype=None,
          vmem_budget=24 << 20):
    """out = (adj @ h) @ weight.T + bias, matching GConv.forward.

    compute_dtype is the dtype fed to the N^2 matmul (bf16 default; pass
    jnp.float32 for closer-to-f32 math at 2x adj-traffic of int8... adj itself
    always travels as int8 since it is 0/1).
    """
    N = adj.shape[0]
    d_in = h.shape[1]
    d_out = weight.shape[0]
    out_dtype = out_dtype or h.dtype
    cbytes = jnp.dtype(compute_dtype).itemsize
    obytes = jnp.dtype(out_dtype).itemsize

    n128 = _round_up(N, 128)
    d_out_pad = _round_up(d_out, 128)            # lane-dense output, full vst

    # Associativity switch: run the N^2 matmul against the narrower feature dim.
    fused = d_in <= d_out
    d_x = _round_up(d_in, 128) if fused else d_out_pad   # lane-dense inner width

    # ---- row tiling (megacore-aware) -------------------------------------
    tile_n = max(128, (min(tile_n, n128) // 128) * 128)
    if n128 >= 4 * 256 and n128 // tile_n < 4 and tile_n > 256:
        tile_n = 256          # >= 4 row slabs of >= 256 rows for 2-TC chips
    n_rows = _round_up(N, tile_n)   # pad the grid up; never collapse the tile

    # ---- column / K tiling, with a correct (single-counted) VMEM budget ---
    # K-independent per-step footprint: bias + out (dbl-buffered) and, for the
    # fused path, W^T + the f32 intermediate and its bf16 cast temporary.
    fixed = 2 * d_out_pad * 4 + 2 * tile_n * d_out_pad * obytes
    if fused:
        fixed += 2 * d_x * d_out_pad * cbytes + tile_n * d_x * (4 + cbytes)

    def _need(tk, with_acc):
        n = (fixed
             + 2 * tile_n * tk * 1           # adj slab (int8, double-buffered)
             + tile_n * tk * cbytes          # in-kernel int8->compute cast temp
             + 2 * tk * d_x * cbytes)        # x slab
        if with_acc:
            n += tile_n * d_x * 4            # f32 accumulator scratch
        return n

    if _need(n128, with_acc=False) <= vmem_budget:
        # Fast path: one contiguous adj row slab per grid step, no K axis.
        k_tiled = False
        tile_k = n128
        n_cols = n128
    else:
        k_tiled = True
        tile_k = max(128, (min(tile_k, n128) // 128) * 128)
        while tile_k > 128 and _need(tile_k, with_acc=True) > vmem_budget:
            tile_k = max(128, (tile_k // 2 // 128) * 128)
        n_cols = _round_up(N, tile_k)
    vmem_need = _need(tile_k, with_acc=k_tiled)

    # ---- operand prep (cheap glue relative to the N^2 matmul) -------------
    # 0/1 adjacency -> int8 is lossless and halves adj HBM traffic vs bf16.
    adj_p = jnp.pad(adj.astype(jnp.int8), ((0, n_rows - N), (0, n_cols - N)))
    bias_p = jnp.pad(bias.astype(jnp.float32).reshape(1, d_out),
                     ((0, 0), (0, d_out_pad - d_out)))

    if fused:
        x = jnp.pad(h.astype(compute_dtype),
                    ((0, n_cols - N), (0, d_x - d_in)))
        wt = jnp.pad(weight.T.astype(compute_dtype),
                     ((0, d_x - d_in), (0, d_out_pad - d_out)))
        extra_inputs = (wt,)
        flops = 2 * N * N * d_in + 2 * N * d_in * d_out
    else:
        hw = jnp.dot(h, weight.T, preferred_element_type=jnp.float32)
        x = jnp.pad(hw, ((0, n_cols - N), (0, d_out_pad - d_out))
                    ).astype(compute_dtype)
        extra_inputs = ()
        flops = 2 * N * N * d_out

    # ---- grid / specs -----------------------------------------------------
    if k_tiled:
        grid = (n_rows // tile_n, n_cols // tile_k)      # reduction axis last
        in_specs = [pl.BlockSpec((tile_n, tile_k), lambda i, k: (i, k)),
                    pl.BlockSpec((tile_k, d_x), lambda i, k: (k, 0))]
        if fused:
            in_specs.append(pl.BlockSpec((d_x, d_out_pad), lambda i, k: (0, 0)))
        in_specs.append(pl.BlockSpec((1, d_out_pad), lambda i, k: (0, 0)))
        out_spec = pl.BlockSpec((tile_n, d_out_pad), lambda i, k: (i, 0))
        scratch = [pltpu.VMEM((tile_n, d_x), jnp.float32)]
        dim_sem = ("parallel", "arbitrary")
        kernel = _fused_ktiled_kernel if fused else _premul_ktiled_kernel
    else:
        grid = (n_rows // tile_n,)
        in_specs = [pl.BlockSpec((tile_n, n_cols), lambda i: (i, 0)),
                    pl.BlockSpec((n_cols, d_x), lambda i: (0, 0))]
        if fused:
            in_specs.append(pl.BlockSpec((d_x, d_out_pad), lambda i: (0, 0)))
        in_specs.append(pl.BlockSpec((1, d_out_pad), lambda i: (0, 0)))
        out_spec = pl.BlockSpec((tile_n, d_out_pad), lambda i: (i, 0))
        scratch = []
        dim_sem = ("parallel",)
        kernel = _fused_nok_kernel if fused else _premul_nok_kernel

    n_row_tiles = n_rows // tile_n
    bytes_accessed = int(
        n_rows * n_cols                                         # adj (int8)
        + (n_row_tiles if k_tiled else 1) * n_cols * d_x * cbytes
        + n_rows * d_out_pad * obytes)
    vmem_limit = int(min(max(vmem_need * 5 // 4 + (2 << 20), 16 << 20),
                         32 << 20))

    out_padded = pl.pallas_call(
        kernel,
        out_shape=jax.ShapeDtypeStruct((n_rows, d_out_pad), out_dtype),
        grid_spec=pltpu.PrefetchScalarGridSpec(
            num_scalar_prefetch=0,
            grid=grid,
            in_specs=in_specs,
            out_specs=out_spec,
            scratch_shapes=scratch),
        compiler_params=pltpu.CompilerParams(
            dimension_semantics=dim_sem,
            vmem_limit_bytes=vmem_limit),
        cost_estimate=pl.CostEstimate(
            flops=flops, transcendentals=0, bytes_accessed=bytes_accessed),
    )(adj_p, x, *extra_inputs, bias_p)

    return out_padded[:N, :d_out]


# ---------------------------------------------------------------------------
# Self-test
# ---------------------------------------------------------------------------
def _matched_ref(adj, h, weight, bias, fused, compute_dtype=jnp.bfloat16):
    """Reference with the same bf16 rounding points as the kernel."""
    if fused:
        ah = jnp.dot(adj.astype(compute_dtype), h.astype(compute_dtype),
                     preferred_element_type=jnp.float32)
        return jnp.dot(ah.astype(compute_dtype),
                       weight.T.astype(compute_dtype),
                       preferred_element_type=jnp.float32) + bias
    hw = jnp.dot(h, weight.T, preferred_element_type=jnp.float32)
    return jnp.dot(adj.astype(compute_dtype), hw.astype(compute_dtype),
                   preferred_element_type=jnp.float32) + bias


def _rel_err(a, b):
    return jnp.linalg.norm(a.astype(jnp.float32) - b.astype(jnp.float32)) / (
        jnp.linalg.norm(b.astype(jnp.float32)) + 1e-12)


if __name__ == "__main__":
    key = jax.random.PRNGKey(0)
    ks = jax.random.split(key, 12)

    def make_case(ka, kh, kw, kb, n, d_in, d_out, bias_scale):
        adj = (jax.random.uniform(ka, (n, n)) > 0.8).astype(jnp.float32)
        h = jax.random.normal(kh, (n, d_in), dtype=jnp.float32)
        limit = (6.0 / (d_in + d_out)) ** 0.5                    # glorot
        w = jax.random.uniform(kw, (d_out, d_in), minval=-limit, maxval=limit,
                               dtype=jnp.float32)
        b = bias_scale * jax.random.normal(kb, (d_out,), dtype=jnp.float32)
        return adj, h, w, b

    # case 1: d_in < d_out -> fused (adj@h)@W^T path, no-K-tiling fast path.
    adj1, h1, w1, b1 = make_case(ks[0], ks[1], ks[2], ks[3], 128, 32, 64, 0.0)
    out1 = jax.block_until_ready(gconv(adj1, h1, w1, b1))
    assert out1.shape == (128, 64)
    assert _rel_err(out1, _matched_ref(adj1, h1, w1, b1, fused=True)) < 1e-2
    assert _rel_err(out1, (adj1 @ h1) @ w1.T + b1) < 3e-2

    # case 2: d_in > d_out, ragged N -> premultiplied adj@(hW^T) path, no-K.
    adj2, h2, w2, b2 = make_case(ks[4], ks[5], ks[6], ks[7], 130, 64, 32, 0.1)
    out2 = jax.block_until_ready(gconv(adj2, h2, w2, b2))
    assert out2.shape == (130, 32)
    assert _rel_err(out2, _matched_ref(adj2, h2, w2, b2, fused=False)) < 1e-2
    assert _rel_err(out2, (adj2 @ h2) @ w2.T + b2) < 3e-2

    # case 3: tiny VMEM budget forces the K-tiled accumulator fallback path.
    adj3, h3, w3, b3 = make_case(ks[8], ks[9], ks[10], ks[11], 384, 32, 32, 0.1)
    out3 = jax.block_until_ready(gconv(adj3, h3, w3, b3, vmem_budget=512 << 10))
    assert out3.shape == (384, 32)
    assert _rel_err(out3, _matched_ref(adj3, h3, w3, b3, fused=True)) < 1e-2
    assert _rel_err(out3, (adj3 @ h3) @ w3.T + b3) < 3e-2

    print("KERNEL_OK")
</pallas_src>

<mosaic_0001>
module attributes {stable_mosaic.version = 11 : i64} {
  func.func @_fused_nok_kernel(%arg0: i32, %arg1: memref<128x128xi8, #tpu.memory_space<vmem>>, %arg2: memref<128x128xbf16, #tpu.memory_space<vmem>>, %arg3: memref<128x128xbf16, #tpu.memory_space<vmem>>, %arg4: memref<1x128xf32, #tpu.memory_space<vmem>>, %arg5: memref<128x128xf32, #tpu.memory_space<vmem>>) attributes {dimension_semantics = [#tpu.dimension_semantics<parallel>], iteration_bounds = array<i64: 1>, scalar_prefetch = 0 : i64, scratch_operands = 0 : i64, tpu.core_type = #tpu.core_type<tc>, window_params = [{transform_indices = @transform_0, window_bounds = array<i64: 128, 128>}, {pipeline_mode = #tpu.pipeline_mode<synchronous>, transform_indices = @transform_1, window_bounds = array<i64: 128, 128>}, {pipeline_mode = #tpu.pipeline_mode<synchronous>, transform_indices = @transform_2, window_bounds = array<i64: 128, 128>}, {pipeline_mode = #tpu.pipeline_mode<synchronous>, transform_indices = @transform_3, window_bounds = array<i64: 1, 128>}, {transform_indices = @transform_4, window_bounds = array<i64: 128, 128>}]} {
    %c0 = arith.constant 0 : index
    %c0_0 = arith.constant 0 : index
    %0 = vector.load %arg1[%c0, %c0_0] : memref<128x128xi8, #tpu.memory_space<vmem>>, vector<128x128xi8>
    %1 = arith.sitofp %0 : vector<128x128xi8> to vector<128x128xbf16>
    %c0_1 = arith.constant 0 : index
    %c0_2 = arith.constant 0 : index
    %2 = vector.load %arg2[%c0_1, %c0_2] : memref<128x128xbf16, #tpu.memory_space<vmem>>, vector<128x128xbf16>
    %cst = arith.constant dense<0.000000e+00> : vector<128x128xf32>
    %3 = tpu.matmul %1, %2, %cst {dimension_numbers = #tpu.dot_dimension_numbers<[1], [0], [0], [1], [0, 0, 1, 1], [], []>} : vector<128x128xbf16>, vector<128x128xbf16>, vector<128x128xf32> -> vector<128x128xf32>
    %4 = arith.truncf %3 : vector<128x128xf32> to vector<128x128xbf16>
    %c0_3 = arith.constant 0 : index
    %c0_4 = arith.constant 0 : index
    %5 = vector.load %arg3[%c0_3, %c0_4] : memref<128x128xbf16, #tpu.memory_space<vmem>>, vector<128x128xbf16>
    %cst_5 = arith.constant dense<0.000000e+00> : vector<128x128xf32>
    %6 = tpu.matmul %4, %5, %cst_5 {dimension_numbers = #tpu.dot_dimension_numbers<[1], [0], [0], [1], [0, 0, 1, 1], [], []>} : vector<128x128xbf16>, vector<128x128xbf16>, vector<128x128xf32> -> vector<128x128xf32>
    %c0_6 = arith.constant 0 : index
    %c0_7 = arith.constant 0 : index
    %7 = vector.load %arg4[%c0_6, %c0_7] : memref<1x128xf32, #tpu.memory_space<vmem>>, vector<1x128xf32>
    %8 = vector.broadcast %7 : vector<1x128xf32> to vector<128x128xf32>
    %9 = arith.addf %6, %8 : vector<128x128xf32>
    %c0_8 = arith.constant 0 : index
    %c0_9 = arith.constant 0 : index
    %10 = vector.load %arg5[%c0_8, %c0_9] : memref<128x128xf32, #tpu.memory_space<vmem>>, vector<128x128xf32>
    tpu.vector_store %arg5[%c0_8, %c0_9], %9 {strides = array<i32>} : memref<128x128xf32, #tpu.memory_space<vmem>>, vector<128x128xf32>,
    return
  }
  func.func @transform_0(%arg0: i32) -> (i32, i32) {
    %c0_i32 = arith.constant 0 : i32
    %c0_i32_0 = arith.constant 0 : i32
    return %arg0, %c0_i32 : i32, i32
  }
  func.func @transform_1(%arg0: i32) -> (i32, i32) {
    %c0_i32 = arith.constant 0 : i32
    %c0_i32_0 = arith.constant 0 : i32
    %c0_i32_1 = arith.constant 0 : i32
    return %c0_i32, %c0_i32_0 : i32, i32
  }
  func.func @transform_2(%arg0: i32) -> (i32, i32) {
    %c0_i32 = arith.constant 0 : i32
    %c0_i32_0 = arith.constant 0 : i32
    %c0_i32_1 = arith.constant 0 : i32
    return %c0_i32, %c0_i32_0 : i32, i32
  }
  func.func @transform_3(%arg0: i32) -> (i32, i32) {
    %c0_i32 = arith.constant 0 : i32
    %c0_i32_0 = arith.constant 0 : i32
    %c0_i32_1 = arith.constant 0 : i32
    return %c0_i32, %c0_i32_0 : i32, i32
  }
  func.func @transform_4(%arg0: i32) -> (i32, i32) {
    %c0_i32 = arith.constant 0 : i32
    %c0_i32_0 = arith.constant 0 : i32
    return %arg0, %c0_i32 : i32, i32
  }
}

</mosaic_0001>

<llo_original>
// kernel: tpu_custom_call.1
$region0: #{tpu_custom_call.1}
  #allocation0 [shape = 'u32[]', space=smem, size = 0x4, offset = 0x4, fixed_abs, tag = 'smem constant byte address 0x4 - core index']
  #allocation1 [shape = 'u32[144,128]{1,0:T(1,128)}', space=vmem, size = 0x12000, scoped, tag = 'internal scratch']
  %s0 = inlined_call_operand.hbm [shape: s8[128,128], index: 0, kind: input, shape index: {}]
  %s1 = inlined_call_operand.hbm [shape: bf16[128,128], index: 1, kind: input, shape index: {}]
  %s2 = inlined_call_operand.hbm [shape: bf16[128,128], index: 2, kind: input, shape index: {}]
  %s3 = inlined_call_operand.vmem [shape: f32[1,128], index: 3, kind: input, shape index: {}]
  %s4 = inlined_call_operand.hbm [shape: f32[128,128], index: 4, kind: output, shape index: {}]
  %s5 = sld [smem:[#allocation0]]
  $region38: #{tpu_custom_call.1} parent=0
    _
  %s7 = ssub.s32 1, %s5
  %s8 = scalar_select 0, %s7, %s5
  $region1: #{tpu_custom_call.1} parent=0
    #allocation2 [shape = 'u8[16384]{0}', space=vmem, size = 0x4000, scoped, tag = 'input window, operand 0, single buffered']
    #allocation3 [shape = 's32[1]{0}', space=sflag, size = 0x4, scoped, tag = 'scoped memory for tpu_custom_call.1']
    #allocation4 [shape = 's32[1]{0}', space=sflag, size = 0x4, scoped, tag = 'scoped memory for tpu_custom_call.1']
    #allocation5 [shape = 'u8[32768]{0}', space=vmem, size = 0x8000, scoped, tag = 'input window, operand 1, single buffered']
    #allocation6 [shape = 's32[1]{0}', space=sflag, size = 0x4, scoped, tag = 'scoped memory for tpu_custom_call.1']
    #allocation7 [shape = 'u8[32768]{0}', space=vmem, size = 0x8000, scoped, tag = 'input window, operand 2, single buffered']
    #allocation8 [shape = 'u8[65536]{0}', space=vmem, size = 0x10000, scoped, tag = 'output window, operand 0, single buffered']
    %9 = vsyncpa [#allocation3], 0
    %10 = vsyncpa [#allocation6], 0
    %11 = vsyncpa [#allocation4], 0
    // Predicated region
    $region2: #{tpu_custom_call.1} parent=1 // pred_check
      _
    $region3: #{tpu_custom_call.1} parent=1 // pred_check_branch
      %13 = sbr.rel (0) target = $region5
    $region4: #{tpu_custom_call.1} parent=1 // pred_region
      %s15 = ssub.s32 512, 512
      %16 = vsyncadd [#allocation3], %s15
      %s17 = sshll.u32 [#allocation2], 4
      %s18 = int_to_ptr.vmem [resolvable:$true] %s17
      %23 = dma.hbm_to_vmem [thread:$0]  %s0, 512, %s18, [#allocation3], 128, 128, 8
    $region5: #{tpu_custom_call.1} parent=1 // pred_fallthru
      _
    // Predicated region
    $region6: #{tpu_custom_call.1} parent=1 // pred_check
      _
    $region7: #{tpu_custom_call.1} parent=1 // pred_check_branch
      %25 = sbr.rel (0) target = $region9
    $region8: #{tpu_custom_call.1} parent=1 // pred_region
      %s27 = ssub.s32 1024, 1024
      %28 = vsyncadd [#allocation6], %s27
      %s29 = sshll.u32 [#allocation5], 4
      %s30 = int_to_ptr.vmem [resolvable:$true] %s29
      %35 = dma.hbm_to_vmem [thread:$0]  %s1, 1024, %s30, [#allocation6], 64, 64, 4
    $region9: #{tpu_custom_call.1} parent=1 // pred_fallthru
      _
    // Predicated region
    $region10: #{tpu_custom_call.1} parent=1 // pred_check
      _
    $region11: #{tpu_custom_call.1} parent=1 // pred_check_branch
      %37 = sbr.rel (0) target = $region13
    $region12: #{tpu_custom_call.1} parent=1 // pred_region
      %s39 = ssub.s32 1024, 1024
      %40 = vsyncadd [#allocation6], %s39
      %s41 = sshll.u32 [#allocation7], 4
      %s42 = int_to_ptr.vmem [resolvable:$true] %s41
      %47 = dma.hbm_to_vmem [thread:$0]  %s2, 1024, %s42, [#allocation6], 64, 64, 4
    $region13: #{tpu_custom_call.1} parent=1 // pred_fallthru
      _
    // Predicated region
    $region14: #{tpu_custom_call.1} parent=1 // pred_check
      _
    $region15: #{tpu_custom_call.1} parent=1 // pred_check_branch
      %49 = sbr.rel (0) target = $region17
    $region16: #{tpu_custom_call.1} parent=1 // pred_region
      _
    $region17: #{tpu_custom_call.1} parent=1 // pred_fallthru
      _
    // Predicated region
    $region18: #{tpu_custom_call.1} parent=1 // pred_check
      _
    $region19: #{tpu_custom_call.1} parent=1 // pred_check_branch
      %51 = sbr.rel (0) target = $region21
    $region20: #{tpu_custom_call.1} parent=1 // pred_region
      %52 = dma.done [#allocation3], 512
    $region21: #{tpu_custom_call.1} parent=1 // pred_fallthru
      _
    // Predicated region
    $region22: #{tpu_custom_call.1} parent=1 // pred_check
      _
    $region23: #{tpu_custom_call.1} parent=1 // pred_check_branch
      %54 = sbr.rel (0) target = $region25
    $region24: #{tpu_custom_call.1} parent=1 // pred_region
      %55 = dma.done [#allocation6], 1024
    $region25: #{tpu_custom_call.1} parent=1 // pred_fallthru
      _
    // Predicated region
    $region26: #{tpu_custom_call.1} parent=1 // pred_check
      _
    $region27: #{tpu_custom_call.1} parent=1 // pred_check_branch
      %57 = sbr.rel (0) target = $region29
    $region28: #{tpu_custom_call.1} parent=1 // pred_region
      %58 = dma.done [#allocation6], 1024
    $region29: #{tpu_custom_call.1} parent=1 // pred_fallthru
      _
    %v60 = vld [vmem:[#allocation2] sm:$0xff]
    %v61 = vld [vmem:[#allocation2 + $0x8] sm:$0xff]
    %v62 = vld [vmem:[#allocation2 + $0x10] sm:$0xff]
    %v63 = vld [vmem:[#allocation2 + $0x18] sm:$0xff]
    %v64 = vunpack.c.l.s8.bf16 %v60
    %v65 = vunpack.c.h.s8.bf16 %v60
    %v66 = vunpack.c.l.s8.bf16 %v61
    %v67 = vunpack.c.h.s8.bf16 %v61
    %v68 = vunpack.c.l.s8.bf16 %v62
    %v69 = vunpack.c.h.s8.bf16 %v62
    %v70 = vunpack.c.l.s8.bf16 %v63
    %v71 = vunpack.c.h.s8.bf16 %v63
    %v72 = vld [vmem:[#allocation5] sm:$0xf]
    %v73 = vld [vmem:[#allocation5 + $0x4] sm:$0xf]
    %v74 = vld [vmem:[#allocation5 + $0x8] sm:$0xf]
    %v75 = vld [vmem:[#allocation5 + $0xc] sm:$0xf]
    %v76 = vld [vmem:[#allocation5 + $0x10] sm:$0xf]
    %v77 = vld [vmem:[#allocation5 + $0x14] sm:$0xf]
    %v78 = vld [vmem:[#allocation5 + $0x18] sm:$0xf]
    %v79 = vld [vmem:[#allocation5 + $0x1c] sm:$0xf]
    %v80 = vld [vmem:[#allocation5 + $0x20] sm:$0xf]
    %v81 = vld [vmem:[#allocation5 + $0x24] sm:$0xf]
    %v82 = vld [vmem:[#allocation5 + $0x28] sm:$0xf]
    %v83 = vld [vmem:[#allocation5 + $0x2c] sm:$0xf]
    %v84 = vld [vmem:[#allocation5 + $0x30] sm:$0xf]
    %v85 = vld [vmem:[#allocation5 + $0x34] sm:$0xf]
    %v86 = vld [vmem:[#allocation5 + $0x38] sm:$0xf]
    %v87 = vld [vmem:[#allocation5 + $0x3c] sm:$0xf]
    %v104 = vunpack.c.l.b16 %v72
    %v105 = vunpack.c.l.b16 %v73
    %v106 = vunpack.c.l.b16 %v74
    %v107 = vunpack.c.l.b16 %v75
    %v108 = vunpack.c.l.b16 %v76
    %v109 = vunpack.c.l.b16 %v77
    %v110 = vunpack.c.l.b16 %v78
    %v111 = vunpack.c.l.b16 %v79
    %v112 = vunpack.c.l.b16 %v80
    %v113 = vunpack.c.l.b16 %v81
    %v114 = vunpack.c.l.b16 %v82
    %v115 = vunpack.c.l.b16 %v83
    %v116 = vunpack.c.l.b16 %v84
    %v117 = vunpack.c.l.b16 %v85
    %v118 = vunpack.c.l.b16 %v86
    %v119 = vunpack.c.l.b16 %v87
    %v120 = vpack.c.b16 %v105, %v104
    %v121 = vpack.c.b16 %v107, %v106
    %v122 = vpack.c.b16 %v109, %v108
    %v123 = vpack.c.b16 %v111, %v110
    %v124 = vpack.c.b16 %v113, %v112
    %v125 = vpack.c.b16 %v115, %v114
    %v126 = vpack.c.b16 %v117, %v116
    %v127 = vpack.c.b16 %v119, %v118
    %136 = vmatprep.subr.bf16.mxu0 0
    %137 = vmatpush1.bf16.msra.mxu0 %v127
    %138 = vmatprep.subr.bf16.mxu0 0
    %139 = vmatpush1.bf16.msra.mxu0 %v126
    %140 = vmatprep.subr.bf16.mxu0 0
    %141 = vmatpush1.bf16.msra.mxu0 %v125
    %142 = vmatprep.subr.bf16.mxu0 0
    %143 = vmatpush1.bf16.msra.mxu0 %v124
    %144 = vmatprep.subr.bf16.mxu0 0
    %145 = vmatpush1.bf16.msra.mxu0 %v123
    %146 = vmatprep.subr.bf16.mxu0 0
    %147 = vmatpush1.bf16.msra.mxu0 %v122
    %148 = vmatprep.subr.bf16.mxu0 0
    %149 = vmatpush1.bf16.msra.mxu0 %v121
    %150 = vmatprep.subr.bf16.mxu0 0
    %151 = vmatpush1.bf16.msra.mxu0 %v120
    %152 = vmatprep.subr.bf16.mxu0 0
    %153 = vmatpush2.bf16.msra.mxu0 0
    %154 = vmatprep.subr.bf16.mxu0 0
    %155 = vmatpush2.bf16.msra.mxu0 0
    %156 = vmatprep.subr.bf16.mxu0 0
    %157 = vmatpush2.bf16.msra.mxu0 0
    %158 = vmatprep.subr.bf16.mxu0 0
    %159 = vmatpush2.bf16.msra.mxu0 0
    %160 = vmatprep.subr.bf16.mxu0 0
    %161 = vmatpush2.bf16.msra.mxu0 0
    %162 = vmatprep.subr.bf16.mxu0 0
    %163 = vmatpush2.bf16.msra.mxu0 0
    %164 = vmatprep.subr.bf16.mxu0 0
    %165 = vmatpush2.bf16.msra.mxu0 0
    %166 = vmatprep.subr.bf16.mxu0 0
    %167 = vmatpush2.bf16.msra.mxu0 0
    %168 = vmatprep.mubr.bf16.mxu0 0
    %169 = vmatmul.mubr.bf16.gmra.mxu0 %v64
    %v170 = vpop.f32.mrf.mxu0
    %v171 = vadd.f32 0.0, %v170
    %v172 = vpop.f32.mrf.mxu0
    %v173 = vpop.f32.mrf.mxu0
    %v174 = vadd.f32 0.0, %v173
    %v175 = vpop.f32.mrf.mxu0
    %176 = vmatprep.mubr.bf16.mxu0 0
    %177 = vmatmul.mubr.bf16.gmra.mxu0 %v65
    %v178 = vpop.f32.mrf.mxu0
    %v179 = vadd.f32 0.0, %v178
    %v180 = vpop.f32.mrf.mxu0
    %v181 = vpop.f32.mrf.mxu0
    %v182 = vadd.f32 0.0, %v181
    %v183 = vpop.f32.mrf.mxu0
    %184 = vmatprep.mubr.bf16.mxu0 0
    %185 = vmatmul.mubr.bf16.gmra.mxu0 %v66
    %v186 = vpop.f32.mrf.mxu0
    %v187 = vadd.f32 0.0, %v186
    %v188 = vpop.f32.mrf.mxu0
    %v189 = vpop.f32.mrf.mxu0
    %v190 = vadd.f32 0.0, %v189
    %v191 = vpop.f32.mrf.mxu0
    %192 = vmatprep.mubr.bf16.mxu0 0
    %193 = vmatmul.mubr.bf16.gmra.mxu0 %v67
    %v194 = vpop.f32.mrf.mxu0
    %v195 = vadd.f32 0.0, %v194
    %v196 = vpop.f32.mrf.mxu0
    %v197 = vpop.f32.mrf.mxu0
    %v198 = vadd.f32 0.0, %v197
    %v199 = vpop.f32.mrf.mxu0
    %200 = vmatprep.mubr.bf16.mxu0 0
    %201 = vmatmul.mubr.bf16.gmra.mxu0 %v68
    %v202 = vpop.f32.mrf.mxu0
    %v203 = vadd.f32 0.0, %v202
    %v204 = vpop.f32.mrf.mxu0
    %v205 = vpop.f32.mrf.mxu0
    %v206 = vadd.f32 0.0, %v205
    %v207 = vpop.f32.mrf.mxu0
    %208 = vmatprep.mubr.bf16.mxu0 0
    %209 = vmatmul.mubr.bf16.gmra.mxu0 %v69
    %v210 = vpop.f32.mrf.mxu0
    %v211 = vadd.f32 0.0, %v210
    %v212 = vpop.f32.mrf.mxu0
    %v213 = vpop.f32.mrf.mxu0
    %v214 = vadd.f32 0.0, %v213
    %v215 = vpop.f32.mrf.mxu0
    %216 = vmatprep.mubr.bf16.mxu0 0
    %217 = vmatmul.mubr.bf16.gmra.mxu0 %v70
    %v218 = vpop.f32.mrf.mxu0
    %v219 = vadd.f32 0.0, %v218
    %v220 = vpop.f32.mrf.mxu0
    %v221 = vpop.f32.mrf.mxu0
    %v222 = vadd.f32 0.0, %v221
    %v223 = vpop.f32.mrf.mxu0
    %224 = vmatprep.mubr.bf16.mxu0 0
    %225 = vmatmul.mubr.bf16.gmra.mxu0 %v71
    %v226 = vpop.f32.mrf.mxu0
    %v227 = vadd.f32 0.0, %v226
    %v228 = vpop.f32.mrf.mxu0
    %v229 = vpop.f32.mrf.mxu0
    %v230 = vadd.f32 0.0, %v229
    %v231 = vpop.f32.mrf.mxu0
    %232 = vdwg.mxu0
    %v233 = vpack.c.bf16 %v174, %v171
    %v234 = vpack.c.bf16 %v182, %v179
    %v235 = vpack.c.bf16 %v190, %v187
    %v236 = vpack.c.bf16 %v198, %v195
    %v237 = vpack.c.bf16 %v206, %v203
    %v238 = vpack.c.bf16 %v214, %v211
    %v239 = vpack.c.bf16 %v222, %v219
    %v240 = vpack.c.bf16 %v230, %v227
    %v241 = vld [vmem:[#allocation7] sm:$0xf]
    %v242 = vld [vmem:[#allocation7 + $0x4] sm:$0xf]
    %v243 = vld [vmem:[#allocation7 + $0x8] sm:$0xf]
    %v244 = vld [vmem:[#allocation7 + $0xc] sm:$0xf]
    %v245 = vld [vmem:[#allocation7 + $0x10] sm:$0xf]
    %v246 = vld [vmem:[#allocation7 + $0x14] sm:$0xf]
    %v247 = vld [vmem:[#allocation7 + $0x18] sm:$0xf]
    %v248 = vld [vmem:[#allocation7 + $0x1c] sm:$0xf]
    %v249 = vld [vmem:[#allocation7 + $0x20] sm:$0xf]
    %v250 = vld [vmem:[#allocation7 + $0x24] sm:$0xf]
    %v251 = vld [vmem:[#allocation7 + $0x28] sm:$0xf]
    %v252 = vld [vmem:[#allocation7 + $0x2c] sm:$0xf]
    %v253 = vld [vmem:[#allocation7 + $0x30] sm:$0xf]
    %v254 = vld [vmem:[#allocation7 + $0x34] sm:$0xf]
    %v255 = vld [vmem:[#allocation7 + $0x38] sm:$0xf]
    %v256 = vld [vmem:[#allocation7 + $0x3c] sm:$0xf]
    %v257 = vld [vmem:[%s3] sm:$0x1]
    %v259 = vlaneseq
    %v260 = vshrl.u32 %v259, 7
    %v261 = vsub.s32 0, %v260
    %v262 = vrot.slane %v257, %v261
    %v280 = vunpack.c.l.b16 %v241
    %v281 = vunpack.c.l.b16 %v242
    %v282 = vunpack.c.l.b16 %v243
    %v283 = vunpack.c.l.b16 %v244
    %v284 = vunpack.c.l.b16 %v245
    %v285 = vunpack.c.l.b16 %v246
    %v286 = vunpack.c.l.b16 %v247
    %v287 = vunpack.c.l.b16 %v248
    %v288 = vunpack.c.l.b16 %v249
    %v289 = vunpack.c.l.b16 %v250
    %v290 = vunpack.c.l.b16 %v251
    %v291 = vunpack.c.l.b16 %v252
    %v292 = vunpack.c.l.b16 %v253
    %v293 = vunpack.c.l.b16 %v254
    %v294 = vunpack.c.l.b16 %v255
    %v295 = vunpack.c.l.b16 %v256
    %v296 = vpack.c.b16 %v281, %v280
    %v297 = vpack.c.b16 %v283, %v282
    %v298 = vpack.c.b16 %v285, %v284
    %v299 = vpack.c.b16 %v287, %v286
    %v300 = vpack.c.b16 %v289, %v288
    %v301 = vpack.c.b16 %v291, %v290
    %v302 = vpack.c.b16 %v293, %v292
    %v303 = vpack.c.b16 %v295, %v294
    %312 = vmatprep.subr.bf16.mxu0 0
    %313 = vmatpush1.bf16.msra.mxu0 %v303
    %314 = vmatprep.subr.bf16.mxu0 0
    %315 = vmatpush1.bf16.msra.mxu0 %v302
    %316 = vmatprep.subr.bf16.mxu0 0
    %317 = vmatpush1.bf16.msra.mxu0 %v301
    %318 = vmatprep.subr.bf16.mxu0 0
    %319 = vmatpush1.bf16.msra.mxu0 %v300
    %320 = vmatprep.subr.bf16.mxu0 0
    %321 = vmatpush1.bf16.msra.mxu0 %v299
    %322 = vmatprep.subr.bf16.mxu0 0
    %323 = vmatpush1.bf16.msra.mxu0 %v298
    %324 = vmatprep.subr.bf16.mxu0 0
    %325 = vmatpush1.bf16.msra.mxu0 %v297
    %326 = vmatprep.subr.bf16.mxu0 0
    %327 = vmatpush1.bf16.msra.mxu0 %v296
    %328 = vmatprep.subr.bf16.mxu0 0
    %329 = vmatpush2.bf16.msra.mxu0 0
    %330 = vmatprep.subr.bf16.mxu0 0
    %331 = vmatpush2.bf16.msra.mxu0 0
    %332 = vmatprep.subr.bf16.mxu0 0
    %333 = vmatpush2.bf16.msra.mxu0 0
    %334 = vmatprep.subr.bf16.mxu0 0
    %335 = vmatpush2.bf16.msra.mxu0 0
    %336 = vmatprep.subr.bf16.mxu0 0
    %337 = vmatpush2.bf16.msra.mxu0 0
    %338 = vmatprep.subr.bf16.mxu0 0
    %339 = vmatpush2.bf16.msra.mxu0 0
    %340 = vmatprep.subr.bf16.mxu0 0
    %341 = vmatpush2.bf16.msra.mxu0 0
    %342 = vmatprep.subr.bf16.mxu0 0
    %343 = vmatpush2.bf16.msra.mxu0 0
    %344 = vmatprep.mubr.bf16.mxu0 0
    %345 = vmatmul.mubr.bf16.gmra.mxu0 %v233
    %v346 = vpop.f32.mrf.mxu0
    %v347 = vadd.f32 %v262, %v346
    %v348 = vpop.f32.mrf.mxu0
    %v349 = vpop.f32.mrf.mxu0
    %v350 = vadd.f32 %v262, %v349
    %v351 = vpop.f32.mrf.mxu0
    %352 = vmatprep.mubr.bf16.mxu0 0
    %353 = vmatmul.mubr.bf16.gmra.mxu0 %v234
    %v354 = vpop.f32.mrf.mxu0
    %v355 = vadd.f32 %v262, %v354
    %v356 = vpop.f32.mrf.mxu0
    %v357 = vpop.f32.mrf.mxu0
    %v358 = vadd.f32 %v262, %v357
    %v359 = vpop.f32.mrf.mxu0
    %360 = vmatprep.mubr.bf16.mxu0 0
    %361 = vmatmul.mubr.bf16.gmra.mxu0 %v235
    %v362 = vpop.f32.mrf.mxu0
    %v363 = vadd.f32 %v262, %v362
    %v364 = vpop.f32.mrf.mxu0
    %v365 = vpop.f32.mrf.mxu0
    %v366 = vadd.f32 %v262, %v365
    %v367 = vpop.f32.mrf.mxu0
    %368 = vmatprep.mubr.bf16.mxu0 0
    %369 = vmatmul.mubr.bf16.gmra.mxu0 %v236
    %v370 = vpop.f32.mrf.mxu0
    %v371 = vadd.f32 %v262, %v370
    %v372 = vpop.f32.mrf.mxu0
    %v373 = vpop.f32.mrf.mxu0
    %v374 = vadd.f32 %v262, %v373
    %v375 = vpop.f32.mrf.mxu0
    %376 = vmatprep.mubr.bf16.mxu0 0
    %377 = vmatmul.mubr.bf16.gmra.mxu0 %v237
    %v378 = vpop.f32.mrf.mxu0
    %v379 = vadd.f32 %v262, %v378
    %v380 = vpop.f32.mrf.mxu0
    %v381 = vpop.f32.mrf.mxu0
    %v382 = vadd.f32 %v262, %v381
    %v383 = vpop.f32.mrf.mxu0
    %384 = vmatprep.mubr.bf16.mxu0 0
    %385 = vmatmul.mubr.bf16.gmra.mxu0 %v238
    %v386 = vpop.f32.mrf.mxu0
    %v387 = vadd.f32 %v262, %v386
    %v388 = vpop.f32.mrf.mxu0
    %v389 = vpop.f32.mrf.mxu0
    %v390 = vadd.f32 %v262, %v389
    %v391 = vpop.f32.mrf.mxu0
    %392 = vmatprep.mubr.bf16.mxu0 0
    %393 = vmatmul.mubr.bf16.gmra.mxu0 %v239
    %v394 = vpop.f32.mrf.mxu0
    %v395 = vadd.f32 %v262, %v394
    %v396 = vpop.f32.mrf.mxu0
    %v397 = vpop.f32.mrf.mxu0
    %v398 = vadd.f32 %v262, %v397
    %v399 = vpop.f32.mrf.mxu0
    %400 = vmatprep.mubr.bf16.mxu0 0
    %401 = vmatmul.mubr.bf16.gmra.mxu0 %v240
    %v402 = vpop.f32.mrf.mxu0
    %v403 = vadd.f32 %v262, %v402
    %v404 = vpop.f32.mrf.mxu0
    %v405 = vpop.f32.mrf.mxu0
    %v406 = vadd.f32 %v262, %v405
    %v407 = vpop.f32.mrf.mxu0
    %408 = vdwg.mxu0
    %409 = vst [vmem:[#allocation8] sm:$0xff] %v347
    %410 = vst [vmem:[#allocation8 + $0x8] sm:$0xff] %v350
    %411 = vst [vmem:[#allocation8 + $0x10] sm:$0xff] %v355
    %412 = vst [vmem:[#allocation8 + $0x18] sm:$0xff] %v358
    %413 = vst [vmem:[#allocation8 + $0x20] sm:$0xff] %v363
    %414 = vst [vmem:[#allocation8 + $0x28] sm:$0xff] %v366
    %415 = vst [vmem:[#allocation8 + $0x30] sm:$0xff] %v371
    %416 = vst [vmem:[#allocation8 + $0x38] sm:$0xff] %v374
    %417 = vst [vmem:[#allocation8 + $0x40] sm:$0xff] %v379
    %418 = vst [vmem:[#allocation8 + $0x48] sm:$0xff] %v382
    %419 = vst [vmem:[#allocation8 + $0x50] sm:$0xff] %v387
    %420 = vst [vmem:[#allocation8 + $0x58] sm:$0xff] %v390
    %421 = vst [vmem:[#allocation8 + $0x60] sm:$0xff] %v395
    %422 = vst [vmem:[#allocation8 + $0x68] sm:$0xff] %v398
    %423 = vst [vmem:[#allocation8 + $0x70] sm:$0xff] %v403
    %424 = vst [vmem:[#allocation8 + $0x78] sm:$0xff] %v406
    // Predicated region
    $region30: #{tpu_custom_call.1} parent=1 // pred_check
      _
    $region31: #{tpu_custom_call.1} parent=1 // pred_check_branch
      %426 = sbr.rel (0) target = $region33
    $region32: #{tpu_custom_call.1} parent=1 // pred_region
      %s428 = ssub.s32 2048, 2048
      %429 = vsyncadd [#allocation4], %s428
      %s430 = sshll.u32 [#allocation8], 4
      %s431 = int_to_ptr.vmem [resolvable:$true] %s430
      %436 = dma.vmem_to_hbm [thread:$0]  %s431, 2048, %s4, [#allocation4], 128, 128, 8
    $region33: #{tpu_custom_call.1} parent=1 // pred_fallthru
      _
    // Predicated region
    $region34: #{tpu_custom_call.1} parent=1 // pred_check
      _
    $region35: #{tpu_custom_call.1} parent=1 // pred_check_branch
      %438 = sbr.rel (0) target = $region37
    $region36: #{tpu_custom_call.1} parent=1 // pred_region
      %439 = dma.done [#allocation4], 2048
    $region37: #{tpu_custom_call.1} parent=1 // pred_fallthru
      _
    %440 = vsyncpa [#allocation3], 1
    %441 = vsyncpa [#allocation6], 1
    %442 = vsyncpa [#allocation4], 1

</llo_original>
